<compile_context>
chip_gen: v7x
topology: tpu7x:2x2x1
jax: 0.10.0
libtpu: 0.0.40
codegen_flags: <defaults>
</compile_context>

<pallas_src>
import functools
import math

import numpy as np
import jax
import jax.numpy as jnp
from jax.experimental import pallas as pl
from jax.experimental.pallas import tpu as pltpu


TILE_M = 1024        # large M tiles: kernels are HBM/overhead-bound
_MIN_SPLIT_M = 512   # below this a single block is cheaper than splitting


def _round_up(x, m):
    return (x + m - 1) // m * m


def _tile_m(m):
    """Row-tile size: big tiles for HBM efficiency, but keep >=2 grid steps
    for mid/large M so the v7x second TensorCore gets work."""
    m8 = _round_up(m, 8)
    if m8 <= _MIN_SPLIT_M:
        return m8
    return min(TILE_M, _round_up((m8 + 1) // 2, 8))


def _block_bytes(shape, dtype):
    return int(np.prod(shape)) * np.dtype(dtype).itemsize


def _mosaic_params(block_bytes_total):
    # Explicit VMEM budget: double-buffered operands (x2) + safety (x2) + headroom,
    # capped at v7x physical VMEM.
    vmem = min(4 * int(block_bytes_total) + (4 << 20), 64 << 20)
    return pltpu.CompilerParams(dimension_semantics=("parallel",),
                                vmem_limit_bytes=vmem)


# ----------------------------------------------------------------------------
# Pallas kernels
# ----------------------------------------------------------------------------
def _matmul_kernel(a_ref, w_ref, o_ref):
    # A cast to bf16 only at the MXU; f32 accumulation; output dtype per spec.
    o_ref[...] = jnp.dot(a_ref[...].astype(jnp.bfloat16), w_ref[...],
                         preferred_element_type=jnp.float32).astype(o_ref.dtype)


def _mean_matmul_kernel(s_ref, c_ref, e_ref, w_ref, o_ref):
    # Fused scatter-mean finalize + matmul.
    #   s: (tm, E*cc) bf16 per-(node, edge_type) feature sums
    #   c: (tm, E)    f32  per-(node, edge_type) neighbor counts (compact)
    #   e: (E, E*cc)  f32  constant expansion matrix (e[j, k] = 1 iff k//cc == j)
    #   w: (E*cc, N)  bf16 resident weights
    # NOTE: pl.reciprocal(approx=True) deviates from exact scatter_mean by
    # ~1e-4 relative; dominated by bf16 matmul error.
    inv = pl.reciprocal(jnp.maximum(c_ref[...], 1.0), approx=True)            # EUP
    inv_wide = jnp.dot(inv, e_ref[...], preferred_element_type=jnp.float32)   # idle MXU
    mean = (s_ref[...].astype(jnp.float32) * inv_wide).astype(jnp.bfloat16)
    o_ref[...] = jnp.dot(mean, w_ref[...],
                         preferred_element_type=jnp.float32).astype(o_ref.dtype)


def _mean_matmul_res_kernel(s_ref, c_ref, e_ref, w_ref, r_ref, o_ref):
    # Same as above with the residual add fused in (f32 accumulate).
    inv = pl.reciprocal(jnp.maximum(c_ref[...], 1.0), approx=True)
    inv_wide = jnp.dot(inv, e_ref[...], preferred_element_type=jnp.float32)
    mean = (s_ref[...].astype(jnp.float32) * inv_wide).astype(jnp.bfloat16)
    out = jnp.dot(mean, w_ref[...], preferred_element_type=jnp.float32)
    o_ref[...] = (out + r_ref[...].astype(jnp.float32)).astype(o_ref.dtype)


def _gn_fused_kernel(x_ref, b_ref, mean_ref, istd_ref, g_ref, beta_ref, o_ref,
                     *, batch_size, apply_silu):
    # Fused GroupNorm normalize + affine (+ SiLU).
    #   x: (tm, C) raw data (f32 or bf16), b: (tm, 1) int32 batch id,
    #   mean/istd: (B, C) f32 per-batch group-adjusted stats, g/beta: (1, C).
    # Per-row stats gathered via one-hot selection matmuls (idle MXU slot);
    # mean subtraction fused here so no (M, C) "diff" intermediate hits HBM.
    bid = b_ref[...]
    onehot = (bid == jax.lax.broadcasted_iota(
        jnp.int32, (bid.shape[0], batch_size), 1)).astype(jnp.float32)
    mean_rows = jnp.dot(onehot, mean_ref[...], preferred_element_type=jnp.float32)
    istd_rows = jnp.dot(onehot, istd_ref[...], preferred_element_type=jnp.float32)
    y = (x_ref[...].astype(jnp.float32) - mean_rows) * istd_rows
    y = y * g_ref[...] + beta_ref[...]
    if apply_silu:
        y = y * (1.0 / (1.0 + jnp.exp(-y)))                                   # SiLU
    o_ref[...] = y.astype(o_ref.dtype)


# ----------------------------------------------------------------------------
# Pallas wrappers
# ----------------------------------------------------------------------------
def pallas_matmul(a, w_bf16, out_dtype=jnp.float32):
    """a (M, K) @ w (K, N) bf16 -> (M, N) out_dtype. M-tiled, weights resident."""
    m, k = a.shape
    k2, n = w_bf16.shape
    assert k == k2
    tm = _tile_m(m)
    blk = (_block_bytes((tm, k), a.dtype) + _block_bytes((k, n), w_bf16.dtype)
           + _block_bytes((tm, n), out_dtype))
    ce = pl.CostEstimate(
        flops=int(2 * m * k * n), transcendentals=0,
        bytes_accessed=int(_block_bytes((m, k), a.dtype)
                           + _block_bytes((k, n), w_bf16.dtype)
                           + _block_bytes((m, n), out_dtype)))
    return pl.pallas_call(
        _matmul_kernel,
        out_shape=jax.ShapeDtypeStruct((m, n), out_dtype),
        grid=(pl.cdiv(m, tm),),
        in_specs=[pl.BlockSpec((tm, k), lambda i: (i, 0)),
                  pl.BlockSpec((k, n), lambda i: (0, 0))],
        out_specs=pl.BlockSpec((tm, n), lambda i: (i, 0)),
        compiler_params=_mosaic_params(blk),
        cost_estimate=ce,
    )(a, w_bf16)


def pallas_mean_matmul(sums, counts, expand, w_bf16, residual=None,
                       out_dtype=jnp.float32):
    """((sums / max(counts, 1)) expanded to feature width) @ w [+ residual]."""
    m, kc = sums.shape
    _, e = counts.shape
    k2, n = w_bf16.shape
    assert k2 == kc and expand.shape == (e, kc)
    tm = _tile_m(m)

    in_specs = [pl.BlockSpec((tm, kc), lambda i: (i, 0)),
                pl.BlockSpec((tm, e), lambda i: (i, 0)),
                pl.BlockSpec((e, kc), lambda i: (0, 0)),
                pl.BlockSpec((kc, n), lambda i: (0, 0))]
    args = [sums, counts, expand, w_bf16]
    blk = (_block_bytes((tm, kc), sums.dtype) + _block_bytes((tm, e), counts.dtype)
           + _block_bytes((e, kc), expand.dtype) + _block_bytes((kc, n), w_bf16.dtype)
           + _block_bytes((tm, n), out_dtype))
    bytes_accessed = (_block_bytes((m, kc), sums.dtype)
                      + _block_bytes((m, e), counts.dtype)
                      + _block_bytes((kc, n), w_bf16.dtype)
                      + _block_bytes((m, n), out_dtype))
    kernel = _mean_matmul_kernel
    if residual is not None:
        in_specs.append(pl.BlockSpec((tm, n), lambda i: (i, 0)))
        args.append(residual)
        blk += _block_bytes((tm, n), residual.dtype)
        bytes_accessed += _block_bytes((m, n), residual.dtype)
        kernel = _mean_matmul_res_kernel

    ce = pl.CostEstimate(flops=int(2 * m * kc * n + 2 * m * e * kc),
                         transcendentals=int(m * e),
                         bytes_accessed=int(bytes_accessed))
    return pl.pallas_call(
        kernel,
        out_shape=jax.ShapeDtypeStruct((m, n), out_dtype),
        grid=(pl.cdiv(m, tm),),
        in_specs=in_specs,
        out_specs=pl.BlockSpec((tm, n), lambda i: (i, 0)),
        compiler_params=_mosaic_params(blk),
        cost_estimate=ce,
    )(*args)


def pallas_gn_fused(data, batch_id, mean, inv_std, gamma, beta, apply_silu,
                    out_dtype):
    """((data - mean[bid]) * inv_std[bid]) * gamma + beta [; SiLU], one kernel."""
    m, c = data.shape
    b = mean.shape[0]
    tm = _tile_m(m)
    bid2 = batch_id.reshape(m, 1).astype(jnp.int32)
    kernel = functools.partial(_gn_fused_kernel, batch_size=b,
                               apply_silu=apply_silu)
    blk = (_block_bytes((tm, c), data.dtype) + _block_bytes((tm, 1), jnp.int32)
           + 2 * _block_bytes((b, c), jnp.float32)
           + 2 * _block_bytes((1, c), jnp.float32)
           + _block_bytes((tm, c), out_dtype))
    ce = pl.CostEstimate(
        flops=int(6 * m * c + 4 * m * b * c),
        transcendentals=int(m * c) if apply_silu else 0,
        bytes_accessed=int(_block_bytes((m, c), data.dtype) + m * 4
                           + 2 * b * c * 4 + 2 * c * 4
                           + _block_bytes((m, c), out_dtype)))
    return pl.pallas_call(
        kernel,
        out_shape=jax.ShapeDtypeStruct((m, c), out_dtype),
        grid=(pl.cdiv(m, tm),),
        in_specs=[pl.BlockSpec((tm, c), lambda i: (i, 0)),
                  pl.BlockSpec((tm, 1), lambda i: (i, 0)),
                  pl.BlockSpec((b, c), lambda i: (0, 0)),
                  pl.BlockSpec((b, c), lambda i: (0, 0)),
                  pl.BlockSpec((1, c), lambda i: (0, 0)),
                  pl.BlockSpec((1, c), lambda i: (0, 0))],
        out_specs=pl.BlockSpec((tm, c), lambda i: (i, 0)),
        compiler_params=_mosaic_params(blk),
        cost_estimate=ce,
    )(data, bid2, mean, inv_std, gamma, beta)


# ----------------------------------------------------------------------------
# DualOctreeGroupNorm (stats in JAX, normalize/affine/SiLU fused in Pallas)
# ----------------------------------------------------------------------------
def _gn_groups(c, group=32):
    if c <= 32:
        group = c // 4
    elif c % group != 0:
        group = 30
    assert c % group == 0
    return group, c // group


def _adjust_for_group(t, group, cpg):
    if cpg > 1:
        c = t.shape[-1]
        t = t.reshape(-1, group, cpg).sum(-1, keepdims=True)
        t = jnp.broadcast_to(t, (t.shape[0], group, cpg)).reshape(-1, c)
    return t


def _group_norm_stats(data, batch_id, batch_size, group, cpg, eps=1e-5):
    # Per-batch statistics need a data-dependent scatter: stays in plain JAX.
    # Accumulate in f32 even when data is bf16.
    data32 = data.astype(jnp.float32)
    ones = jnp.ones((data32.shape[0], 1), jnp.float32)
    count = jax.ops.segment_sum(ones, batch_id, num_segments=batch_size) * cpg
    inv_count = 1.0 / (count + eps)
    mean = jax.ops.segment_sum(data32, batch_id, num_segments=batch_size) * inv_count
    mean = _adjust_for_group(mean, group, cpg)
    diff = data32 - mean[batch_id]
    var = jax.ops.segment_sum(diff * diff, batch_id,
                              num_segments=batch_size) * inv_count
    var = _adjust_for_group(var, group, cpg)
    inv_std = 1.0 / jnp.sqrt(var + eps)
    return mean, inv_std


def group_norm(data, gn, batch_id, batch_size, apply_silu, out_dtype,
               use_pallas=True):
    mean, inv_std = _group_norm_stats(data, batch_id, batch_size,
                                      gn["group"], gn["cpg"])
    if use_pallas:
        return pallas_gn_fused(data, batch_id, mean, inv_std,
                               gn["weight"], gn["bias"], apply_silu, out_dtype)
    y = ((data.astype(jnp.float32) - mean[batch_id]) * inv_std[batch_id]
         * gn["weight"] + gn["bias"])
    if apply_silu:
        y = y * (1.0 / (1.0 + jnp.exp(-y)))
    return y.astype(out_dtype)


# ----------------------------------------------------------------------------
# GraphConv (gather/scatter in JAX, mean + matmul [+ residual] in Pallas)
# ----------------------------------------------------------------------------
def _expand_matrix(e, cc):
    k = np.arange(e * cc) // cc
    return jnp.asarray((k[None, :] == np.arange(e)[:, None]).astype(np.float32))


def graph_conv(x, w_bf16, graph, n_edge_type, n_node_type,
               residual=None, out_dtype=jnp.float32, use_pallas=True):
    node_type = graph["node_type"]
    if node_type is not None and n_node_type > 1:
        one_hot = jax.nn.one_hot(node_type, n_node_type, dtype=x.dtype)
        x = jnp.concatenate([x, one_hot], axis=1)
    row, col = graph["edge_idx"][0], graph["edge_idx"][1]
    index = row * n_edge_type + graph["edge_dir"]
    n_nodes, cc = x.shape
    dim_size = n_nodes * n_edge_type

    # TODO(synk): data-dependent gather + segment-sum (scatter_mean) stays in
    # plain JAX; a fully fused Pallas version needs CSR-sorted edges with
    # scalar-prefetch row offsets driving a manual make_async_copy gather,
    # which would also remove the (M, E*cc) sums intermediate from HBM.
    gathered = x[col].astype(jnp.float32)                             # (E, cc)
    sums = jax.ops.segment_sum(gathered, index, num_segments=dim_size)
    cnt = jax.ops.segment_sum(jnp.ones((gathered.shape[0],), jnp.float32),
                              index, num_segments=dim_size)
    # Sums accumulated in f32, stored bf16: halves the largest HBM stream.
    s2 = sums.reshape(n_nodes, n_edge_type * cc).astype(jnp.bfloat16)
    c2 = cnt.reshape(n_nodes, n_edge_type)            # compact counts

    if use_pallas:
        expand = _expand_matrix(n_edge_type, cc)
        return pallas_mean_matmul(s2, c2, expand, w_bf16, residual, out_dtype)

    inv = 1.0 / jnp.maximum(c2, 1.0)
    mean = (s2.astype(jnp.float32)
            * jnp.repeat(inv, cc, axis=1)).astype(jnp.bfloat16)
    out = jnp.dot(mean, w_bf16, preferred_element_type=jnp.float32)
    if residual is not None:
        out = out + residual.astype(jnp.float32)
    return out.astype(out_dtype)


# ----------------------------------------------------------------------------
# GraphResBlock forward
# ----------------------------------------------------------------------------
def graph_res_block_forward(x, params, doctree, depth, use_pallas=True):
    batch_id = doctree["batch_id"][depth]
    batch_size = doctree["batch_size"]
    graph = doctree["graph"][depth]
    n_edge_type = params["n_edge_type"]
    n_node_type = params["n_node_type"]
    bf16 = jnp.bfloat16

    # h = conv1(SiLU(norm1(x)))        -- bf16 intermediates
    h = group_norm(x, params["norm1"], batch_id, batch_size,
                   apply_silu=True, out_dtype=bf16, use_pallas=use_pallas)
    h = graph_conv(h, params["conv1_w"], graph, n_edge_type, n_node_type,
                   residual=None, out_dtype=bf16, use_pallas=use_pallas)

    # h = dropout(SiLU(norm2(h)))
    h = group_norm(h, params["norm2"], batch_id, batch_size,
                   apply_silu=True, out_dtype=bf16, use_pallas=use_pallas)
    # TODO(synk): torch.nn.Dropout is identity at inference; training-mode
    # dropout would use pltpu.prng_seed / prng_random_bits.

    # Shortcut: Conv1x1 + GroupNorm when channel_in != channel_out.
    if params["channel_in"] != params["channel_out"]:
        if use_pallas:
            sc = pallas_matmul(x, params["conv1x1_w"], out_dtype=bf16)
        else:
            sc = jnp.dot(x.astype(bf16), params["conv1x1_w"],
                         preferred_element_type=jnp.float32).astype(bf16)
        sc = group_norm(sc, params["norm_sc"], batch_id, batch_size,
                        apply_silu=False, out_dtype=bf16, use_pallas=use_pallas)
    else:
        sc = x

    # out = conv2(h) + shortcut   (residual add fused into the Pallas kernel)
    out = graph_conv(h, params["conv2_w"], graph, n_edge_type, n_node_type,
                     residual=sc, out_dtype=jnp.float32, use_pallas=use_pallas)
    return out


# ----------------------------------------------------------------------------
# Pure-f32 plain-JAX reference (f32 weights, no bf16, no Pallas) for precision
# validation against the original PyTorch math.
# ----------------------------------------------------------------------------
def reference_forward_f32(x, params, doctree, depth):
    batch_id = doctree["batch_id"][depth]
    batch_size = doctree["batch_size"]
    graph = doctree["graph"][depth]
    n_edge_type = params["n_edge_type"]
    n_node_type = params["n_node_type"]

    def gn(data, p):
        mean, inv_std = _group_norm_stats(data, batch_id, batch_size,
                                          p["group"], p["cpg"])
        return (data - mean[batch_id]) * inv_std[batch_id] * p["weight"] + p["bias"]

    def silu(v):
        return v * jax.nn.sigmoid(v)

    def gconv(h, w):
        node_type = graph["node_type"]
        if node_type is not None and n_node_type > 1:
            one_hot = jax.nn.one_hot(node_type, n_node_type, dtype=h.dtype)
            h = jnp.concatenate([h, one_hot], axis=1)
        row, col = graph["edge_idx"][0], graph["edge_idx"][1]
        index = row * n_edge_type + graph["edge_dir"]
        n_nodes = h.shape[0]
        dim_size = n_nodes * n_edge_type
        sums = jax.ops.segment_sum(h[col], index, num_segments=dim_size)
        cnt = jax.ops.segment_sum(jnp.ones((col.shape[0],), h.dtype), index,
                                  num_segments=dim_size)
        mean = sums / jnp.maximum(cnt, 1.0)[:, None]
        return mean.reshape(n_nodes, -1) @ w

    h = silu(gn(x, params["norm1"]))
    h = gconv(h, params["conv1_w_f32"])
    h = silu(gn(h, params["norm2"]))
    if params["channel_in"] != params["channel_out"]:
        sc = gn(x @ params["conv1x1_w_f32"], params["norm_sc"])
    else:
        sc = x
    return gconv(h, params["conv2_w_f32"]) + sc


# ----------------------------------------------------------------------------
# Deterministic setup + run
# ----------------------------------------------------------------------------
def init_params(key, channel_in, channel_out, n_edge_type, avg_degree,
                n_node_type):
    keys = jax.random.split(key, 3)
    node_channel = n_node_type if n_node_type > 1 else 0

    def graph_conv_w(k, cin, cout):
        fan_in = avg_degree * cin
        fan_out = avg_degree * cout
        a = math.sqrt(3.0) * math.sqrt(2.0 / (fan_in + fan_out))
        return jax.random.uniform(k, (n_edge_type * (cin + node_channel), cout),
                                  minval=-a, maxval=a, dtype=jnp.float32)

    def gn_params(c):
        group, cpg = _gn_groups(c)
        return {"group": group, "cpg": cpg,
                "weight": jnp.ones((1, c), jnp.float32),
                "bias": jnp.zeros((1, c), jnp.float32)}

    a_sc = 1.0 / math.sqrt(channel_in)
    conv1_w = graph_conv_w(keys[0], channel_in, channel_out)
    conv2_w = graph_conv_w(keys[1], channel_out, channel_out)
    conv1x1_w = jax.random.uniform(keys[2], (channel_in, channel_out),
                                   minval=-a_sc, maxval=a_sc, dtype=jnp.float32)

    return {
        "channel_in": channel_in,
        "channel_out": channel_out,
        "n_edge_type": n_edge_type,
        "n_node_type": n_node_type,
        # Weights pre-cast to bf16 once, outside the hot path; f32 copies kept
        # only for the precision-validation reference.
        "conv1_w": conv1_w.astype(jnp.bfloat16),
        "conv2_w": conv2_w.astype(jnp.bfloat16),
        "conv1x1_w": conv1x1_w.astype(jnp.bfloat16),
        "conv1_w_f32": conv1_w,
        "conv2_w_f32": conv2_w,
        "conv1x1_w_f32": conv1x1_w,
        "norm1": gn_params(channel_in),
        "norm2": gn_params(channel_out),
        "norm_sc": gn_params(channel_out),
    }


def main():
    key = jax.random.PRNGKey(0)
    channel_in, channel_out = 16, 32
    n_edge_type, avg_degree, n_node_type = 7, 7, 7
    depth = 3
    n_nodes, batch_size, n_edges = 30, 2, 200

    keys = jax.random.split(key, 8)
    x = jax.random.normal(keys[0], (n_nodes, channel_in), dtype=jnp.float32)
    batch_id = jnp.concatenate([jnp.zeros((14,), jnp.int32),
                                jnp.ones((n_nodes - 14,), jnp.int32)])
    edge_row = jax.random.randint(keys[1], (n_edges,), 0, n_nodes, dtype=jnp.int32)
    edge_col = jax.random.randint(keys[2], (n_edges,), 0, n_nodes, dtype=jnp.int32)
    edge_dir = jax.random.randint(keys[3], (n_edges,), 0, n_edge_type, dtype=jnp.int32)
    node_type = jax.random.randint(keys[4], (n_nodes,), 0, n_node_type, dtype=jnp.int32)

    doctree = {
        "batch_size": batch_size,
        "batch_id": {depth: batch_id},
        "graph": {depth: {"edge_idx": jnp.stack([edge_row, edge_col], axis=0),
                          "edge_dir": edge_dir,
                          "node_type": node_type}},
    }
    params = init_params(keys[5], channel_in, channel_out,
                         n_edge_type, avg_degree, n_node_type)

    out = graph_res_block_forward(x, params, doctree, depth, use_pallas=True)
    out = jax.block_until_ready(out)
    assert out.shape == (n_nodes, channel_out), out.shape

    # Same-dtype pure-JAX path (bf16 weights/activations, no Pallas): tight check.
    ref = graph_res_block_forward(x, params, doctree, depth, use_pallas=False)
    ref = jax.block_until_ready(ref)
    np.testing.assert_allclose(np.asarray(out), np.asarray(ref),
                               rtol=2e-2, atol=2e-2)

    # Full-precision f32 reference (no bf16 anywhere): looser check catches
    # any precision regression relative to the original PyTorch math.
    ref32 = jax.block_until_ready(reference_forward_f32(x, params, doctree, depth))
    np.testing.assert_allclose(np.asarray(out), np.asarray(ref32),
                               rtol=1e-1, atol=1e-1)

    print("KERNEL_OK")


if __name__ == "__main__":
    main()
</pallas_src>

<mosaic_0001>
module attributes {stable_mosaic.version = 11 : i64} {
  func.func @_gn_fused_kernel(%arg0: i32, %arg1: memref<32x16xf32, #tpu.memory_space<vmem>>, %arg2: memref<32x1xi32, #tpu.memory_space<vmem>>, %arg3: memref<2x16xf32, #tpu.memory_space<vmem>>, %arg4: memref<2x16xf32, #tpu.memory_space<vmem>>, %arg5: memref<1x16xf32, #tpu.memory_space<vmem>>, %arg6: memref<1x16xf32, #tpu.memory_space<vmem>>, %arg7: memref<32x16xbf16, #tpu.memory_space<vmem>>) attributes {dimension_semantics = [#tpu.dimension_semantics<parallel>], iteration_bounds = array<i64: 1>, scalar_prefetch = 0 : i64, scratch_operands = 0 : i64, tpu.core_type = #tpu.core_type<tc>, window_params = [{transform_indices = @transform_0, window_bounds = array<i64: 32, 16>}, {transform_indices = @transform_1, window_bounds = array<i64: 32, 1>}, {pipeline_mode = #tpu.pipeline_mode<synchronous>, transform_indices = @transform_2, window_bounds = array<i64: 2, 16>}, {pipeline_mode = #tpu.pipeline_mode<synchronous>, transform_indices = @transform_3, window_bounds = array<i64: 2, 16>}, {pipeline_mode = #tpu.pipeline_mode<synchronous>, transform_indices = @transform_4, window_bounds = array<i64: 1, 16>}, {pipeline_mode = #tpu.pipeline_mode<synchronous>, transform_indices = @transform_5, window_bounds = array<i64: 1, 16>}, {transform_indices = @transform_6, window_bounds = array<i64: 32, 16>}]} {
    %c0 = arith.constant 0 : index
    %c0_0 = arith.constant 0 : index
    %0 = vector.load %arg2[%c0, %c0_0] : memref<32x1xi32, #tpu.memory_space<vmem>>, vector<32x1xi32>
    %1 = tpu.iota {dimensions = array<i32: 1>} : vector<32x2xi32>
    %2 = vector.broadcast %0 : vector<32x1xi32> to vector<32x2xi32>
    %3 = arith.cmpi eq, %2, %1 : vector<32x2xi32>
    %4 = arith.extui %3 : vector<32x2xi1> to vector<32x2xi32>
    %5 = arith.sitofp %4 : vector<32x2xi32> to vector<32x2xf32>
    %c0_1 = arith.constant 0 : index
    %c0_2 = arith.constant 0 : index
    %6 = vector.load %arg3[%c0_1, %c0_2] : memref<2x16xf32, #tpu.memory_space<vmem>>, vector<2x16xf32>
    %cst = arith.constant dense<0.000000e+00> : vector<32x16xf32>
    %7 = tpu.matmul %5, %6, %cst {dimension_numbers = #tpu.dot_dimension_numbers<[1], [0], [0], [1], [0, 0, 1, 1], [], []>} : vector<32x2xf32>, vector<2x16xf32>, vector<32x16xf32> -> vector<32x16xf32>
    %c0_3 = arith.constant 0 : index
    %c0_4 = arith.constant 0 : index
    %8 = vector.load %arg4[%c0_3, %c0_4] : memref<2x16xf32, #tpu.memory_space<vmem>>, vector<2x16xf32>
    %cst_5 = arith.constant dense<0.000000e+00> : vector<32x16xf32>
    %9 = tpu.matmul %5, %8, %cst_5 {dimension_numbers = #tpu.dot_dimension_numbers<[1], [0], [0], [1], [0, 0, 1, 1], [], []>} : vector<32x2xf32>, vector<2x16xf32>, vector<32x16xf32> -> vector<32x16xf32>
    %c0_6 = arith.constant 0 : index
    %c0_7 = arith.constant 0 : index
    %10 = vector.load %arg1[%c0_6, %c0_7] : memref<32x16xf32, #tpu.memory_space<vmem>>, vector<32x16xf32>
    %11 = arith.subf %10, %7 : vector<32x16xf32>
    %12 = arith.mulf %11, %9 : vector<32x16xf32>
    %c0_8 = arith.constant 0 : index
    %c0_9 = arith.constant 0 : index
    %13 = vector.load %arg5[%c0_8, %c0_9] : memref<1x16xf32, #tpu.memory_space<vmem>>, vector<1x16xf32>
    %14 = vector.broadcast %13 : vector<1x16xf32> to vector<32x16xf32>
    %15 = arith.mulf %12, %14 : vector<32x16xf32>
    %c0_10 = arith.constant 0 : index
    %c0_11 = arith.constant 0 : index
    %16 = vector.load %arg6[%c0_10, %c0_11] : memref<1x16xf32, #tpu.memory_space<vmem>>, vector<1x16xf32>
    %17 = vector.broadcast %16 : vector<1x16xf32> to vector<32x16xf32>
    %18 = arith.addf %15, %17 : vector<32x16xf32>
    %cst_12 = arith.constant 0.000000e+00 : f32
    %19 = vector.broadcast %cst_12 : f32 to vector<32x16xf32>
    %20 = arith.subf %19, %18 : vector<32x16xf32>
    %21 = math.exp %20 : vector<32x16xf32>
    %cst_13 = arith.constant 1.000000e+00 : f32
    %22 = vector.broadcast %cst_13 : f32 to vector<32x16xf32>
    %23 = arith.addf %22, %21 : vector<32x16xf32>
    %cst_14 = arith.constant 1.000000e+00 : f32
    %24 = vector.broadcast %cst_14 : f32 to vector<32x16xf32>
    %25 = arith.divf %24, %23 : vector<32x16xf32>
    %26 = arith.mulf %18, %25 : vector<32x16xf32>
    %27 = arith.truncf %26 : vector<32x16xf32> to vector<32x16xbf16>
    %c0_15 = arith.constant 0 : index
    %c0_16 = arith.constant 0 : index
    %28 = vector.load %arg7[%c0_15, %c0_16] : memref<32x16xbf16, #tpu.memory_space<vmem>>, vector<32x16xbf16>
    tpu.vector_store %arg7[%c0_15, %c0_16], %27 {strides = array<i32>} : memref<32x16xbf16, #tpu.memory_space<vmem>>, vector<32x16xbf16>,
    return
  }
  func.func @transform_0(%arg0: i32) -> (i32, i32) {
    %c0_i32 = arith.constant 0 : i32
    %c0_i32_0 = arith.constant 0 : i32
    return %arg0, %c0_i32 : i32, i32
  }
  func.func @transform_1(%arg0: i32) -> (i32, i32) {
    %c0_i32 = arith.constant 0 : i32
    %c0_i32_0 = arith.constant 0 : i32
    return %arg0, %c0_i32 : i32, i32
  }
  func.func @transform_2(%arg0: i32) -> (i32, i32) {
    %c0_i32 = arith.constant 0 : i32
    %c0_i32_0 = arith.constant 0 : i32
    %c0_i32_1 = arith.constant 0 : i32
    return %c0_i32, %c0_i32_0 : i32, i32
  }
  func.func @transform_3(%arg0: i32) -> (i32, i32) {
    %c0_i32 = arith.constant 0 : i32
    %c0_i32_0 = arith.constant 0 : i32
    %c0_i32_1 = arith.constant 0 : i32
    return %c0_i32, %c0_i32_0 : i32, i32
  }
  func.func @transform_4(%arg0: i32) -> (i32, i32) {
    %c0_i32 = arith.constant 0 : i32
    %c0_i32_0 = arith.constant 0 : i32
    %c0_i32_1 = arith.constant 0 : i32
    return %c0_i32, %c0_i32_0 : i32, i32
  }
  func.func @transform_5(%arg0: i32) -> (i32, i32) {
    %c0_i32 = arith.constant 0 : i32
    %c0_i32_0 = arith.constant 0 : i32
    %c0_i32_1 = arith.constant 0 : i32
    return %c0_i32, %c0_i32_0 : i32, i32
  }
  func.func @transform_6(%arg0: i32) -> (i32, i32) {
    %c0_i32 = arith.constant 0 : i32
    %c0_i32_0 = arith.constant 0 : i32
    return %arg0, %c0_i32 : i32, i32
  }
}

</mosaic_0001>

<llo_original>
// kernel: tpu_custom_call.1
$region0: #{tpu_custom_call.1}
  #allocation0 [shape = 'u32[]', space=smem, size = 0x4, offset = 0x4, fixed_abs, tag = 'smem constant byte address 0x4 - core index']
  #allocation1 [shape = 'u32[144,128]{1,0:T(1,128)}', space=vmem, size = 0x12000, scoped, tag = 'internal scratch']
  %s0 = inlined_call_operand.vmem [shape: f32[30,16], index: 0, kind: input, shape index: {}]
  %s1 = inlined_call_operand.vmem [shape: s32[30,1], index: 1, kind: input, shape index: {}]
  %s2 = inlined_call_operand.vmem [shape: f32[2,16], index: 2, kind: input, shape index: {}]
  %s3 = inlined_call_operand.vmem [shape: f32[2,16], index: 3, kind: input, shape index: {}]
  %s4 = inlined_call_operand.vmem [shape: f32[1,16], index: 4, kind: input, shape index: {}]
  %s5 = inlined_call_operand.vmem [shape: f32[1,16], index: 5, kind: input, shape index: {}]
  %s6 = inlined_call_operand.vmem [shape: bf16[30,16], index: 6, kind: output, shape index: {}]
  %s7 = sld [smem:[#allocation0]]
  $region34: #{tpu_custom_call.1} parent=0
    _
  %s9 = ssub.s32 1, %s7
  %s10 = scalar_select 0, %s9, %s7
  // Predicated region
  $region2: #{tpu_custom_call.1} parent=0 // pred_check
    _
  $region3: #{tpu_custom_call.1} parent=0 // pred_check_branch
    %12 = sbr.rel (0) target = $region5
  $region4: #{tpu_custom_call.1} parent=0 // pred_region
    _
  $region5: #{tpu_custom_call.1} parent=0 // pred_fallthru
    _
  // Predicated region
  $region6: #{tpu_custom_call.1} parent=0 // pred_check
    _
  $region7: #{tpu_custom_call.1} parent=0 // pred_check_branch
    %14 = sbr.rel (0) target = $region9
  $region8: #{tpu_custom_call.1} parent=0 // pred_region
    _
  $region9: #{tpu_custom_call.1} parent=0 // pred_fallthru
    _
  // Predicated region
  $region10: #{tpu_custom_call.1} parent=0 // pred_check
    _
  $region11: #{tpu_custom_call.1} parent=0 // pred_check_branch
    %16 = sbr.rel (0) target = $region13
  $region12: #{tpu_custom_call.1} parent=0 // pred_region
    _
  $region13: #{tpu_custom_call.1} parent=0 // pred_fallthru
    _
  // Predicated region
  $region14: #{tpu_custom_call.1} parent=0 // pred_check
    _
  $region15: #{tpu_custom_call.1} parent=0 // pred_check_branch
    %18 = sbr.rel (0) target = $region17
  $region16: #{tpu_custom_call.1} parent=0 // pred_region
    _
  $region17: #{tpu_custom_call.1} parent=0 // pred_fallthru
    _
  // Predicated region
  $region18: #{tpu_custom_call.1} parent=0 // pred_check
    _
  $region19: #{tpu_custom_call.1} parent=0 // pred_check_branch
    %20 = sbr.rel (0) target = $region21
  $region20: #{tpu_custom_call.1} parent=0 // pred_region
    _
  $region21: #{tpu_custom_call.1} parent=0 // pred_fallthru
    _
  // Predicated region
  $region22: #{tpu_custom_call.1} parent=0 // pred_check
    _
  $region23: #{tpu_custom_call.1} parent=0 // pred_check_branch
    %22 = sbr.rel (0) target = $region25
  $region24: #{tpu_custom_call.1} parent=0 // pred_region
    _
  $region25: #{tpu_custom_call.1} parent=0 // pred_fallthru
    _
  %v23 = vld [vmem:[%s1] sm:$0xff]
  %v24 = vld [vmem:[%s1 + $0x8] sm:$0xff]
  %v25 = vld [vmem:[%s1 + $0x10] sm:$0xff]
  %v26 = vld [vmem:[%s1 + $0x18] sm:$0xff]
  %v27 = vlaneseq
  %v28 = vand.u32 %v27, 127
  %29 = vset.pattern.permute.xlu0 0
  %30 = vperm.xlu0 %29, %v23
  %v31 = vpop.permute.xlu0 %30
  %32 = vset.pattern.permute.xlu0 0
  %33 = vperm.xlu0 %32, %v24
  %v34 = vpop.permute.xlu0 %33
  %35 = vset.pattern.permute.xlu0 0
  %36 = vperm.xlu0 %35, %v25
  %v37 = vpop.permute.xlu0 %36
  %38 = vset.pattern.permute.xlu0 0
  %39 = vperm.xlu0 %38, %v26
  %v40 = vpop.permute.xlu0 %39
  %vm41 = vcmp.eq.s32.totalorder %v31, %v28
  %vm42 = vcmp.eq.s32.totalorder %v34, %v28
  %vm43 = vcmp.eq.s32.totalorder %v37, %v28
  %vm44 = vcmp.eq.s32.totalorder %v40, %v28
  %v45 = vsel %vm41, 1, 0
  %v46 = vsel %vm42, 1, 0
  %v47 = vsel %vm43, 1, 0
  %v48 = vsel %vm44, 1, 0
  %v49 = vcvt.s32.f32 %v45
  %v50 = vcvt.s32.f32 %v46
  %v51 = vcvt.s32.f32 %v47
  %v52 = vcvt.s32.f32 %v48
  %v53 = vld [vmem:[%s2] sm:$0x3]
  %vm54 = vcmask 15360
  %v56 = vsel %vm54, %v49, 0
  %v59 = vsel %vm54, %v50, 0
  %v62 = vsel %vm54, %v51, 0
  %v65 = vsel %vm54, %v52, 0
  %vm67 = vcmask 1041408
  %v69 = vsel %vm67, %v53, 0
  %71 = vmatprep.subr.mxu0 0.0
  %72 = vmatpush1.msra.mxu0 %v69
  %73 = vmatprep.subr.mxu0 0.0
  %74 = vmatpush1.msra.mxu0 0.0
  %75 = vmatprep.subr.mxu0 0.0
  %76 = vmatpush1.msra.mxu0 0.0
  %77 = vmatprep.subr.mxu0 0.0
  %78 = vmatpush1.msra.mxu0 0.0
  %79 = vmatprep.subr.mxu0 0.0
  %80 = vmatpush1.msra.mxu0 0.0
  %81 = vmatprep.subr.mxu0 0.0
  %82 = vmatpush1.msra.mxu0 0.0
  %83 = vmatprep.subr.mxu0 0.0
  %84 = vmatpush1.msra.mxu0 0.0
  %85 = vmatprep.subr.mxu0 0.0
  %86 = vmatpush1.msra.mxu0 0.0
  %87 = vmatprep.subr.mxu0 0.0
  %88 = vmatpush1.msra.mxu0 0.0
  %89 = vmatprep.subr.mxu0 0.0
  %90 = vmatpush1.msra.mxu0 0.0
  %91 = vmatprep.subr.mxu0 0.0
  %92 = vmatpush1.msra.mxu0 0.0
  %93 = vmatprep.subr.mxu0 0.0
  %94 = vmatpush1.msra.mxu0 0.0
  %95 = vmatprep.subr.mxu0 0.0
  %96 = vmatpush1.msra.mxu0 0.0
  %97 = vmatprep.subr.mxu0 0.0
  %98 = vmatpush1.msra.mxu0 0.0
  %99 = vmatprep.subr.mxu0 0.0
  %100 = vmatpush1.msra.mxu0 0.0
  %101 = vmatprep.subr.mxu0 0.0
  %102 = vmatpush1.msra.mxu0 0.0
  %103 = vmatprep.subr.mxu0 0.0
  %104 = vmatpush1.msra.mxu0 0.0
  %105 = vmatprep.subr.mxu0 0.0
  %106 = vmatpush1.msra.mxu0 0.0
  %107 = vmatprep.subr.mxu0 0.0
  %108 = vmatpush1.msra.mxu0 0.0
  %109 = vmatprep.subr.mxu0 0.0
  %110 = vmatpush1.msra.mxu0 0.0
  %111 = vmatprep.subr.mxu0 0.0
  %112 = vmatpush1.msra.mxu0 0.0
  %113 = vmatprep.subr.mxu0 0.0
  %114 = vmatpush1.msra.mxu0 0.0
  %115 = vmatprep.subr.mxu0 0.0
  %116 = vmatpush1.msra.mxu0 0.0
  %117 = vmatprep.subr.mxu0 0.0
  %118 = vmatpush1.msra.mxu0 0.0
  %119 = vmatprep.subr.mxu0 0.0
  %120 = vmatpush1.msra.mxu0 0.0
  %121 = vmatprep.subr.mxu0 0.0
  %122 = vmatpush1.msra.mxu0 0.0
  %123 = vmatprep.subr.mxu0 0.0
  %124 = vmatpush1.msra.mxu0 0.0
  %125 = vmatprep.subr.mxu0 0.0
  %126 = vmatpush1.msra.mxu0 0.0
  %127 = vmatprep.subr.mxu0 0.0
  %128 = vmatpush1.msra.mxu0 0.0
  %129 = vmatprep.subr.mxu0 0.0
  %130 = vmatpush1.msra.mxu0 0.0
  %131 = vmatprep.subr.mxu0 0.0
  %132 = vmatpush1.msra.mxu0 0.0
  %133 = vmatprep.subr.mxu0 0.0
  %134 = vmatpush1.msra.mxu0 0.0
  %135 = vmatprep.mubr.f32.mxu0 0.0
  %136 = vmatmul.mubr.f32.gmra.mrb[0].mxu0 %v56
  %v137 = vpop.f32.mrb[0].mxu0
  %v138 = vadd.f32 0.0, %v137
  %v139 = vpop.f32.mrb[0].mxu0
  %140 = vmatprep.mubr.f32.mxu0 0.0
  %141 = vmatmul.mubr.f32.gmra.mrb[0].mxu0 %v59
  %v142 = vpop.f32.mrb[0].mxu0
  %v143 = vadd.f32 0.0, %v142
  %v144 = vpop.f32.mrb[0].mxu0
  %145 = vmatprep.mubr.f32.mxu0 0.0
  %146 = vmatmul.mubr.f32.gmra.mrb[0].mxu0 %v62
  %v147 = vpop.f32.mrb[0].mxu0
  %v148 = vadd.f32 0.0, %v147
  %v149 = vpop.f32.mrb[0].mxu0
  %150 = vmatprep.mubr.f32.mxu0 0.0
  %151 = vmatmul.mubr.f32.gmra.mrb[0].mxu0 %v65
  %v152 = vpop.f32.mrb[0].mxu0
  %v153 = vadd.f32 0.0, %v152
  %v154 = vpop.f32.mrb[0].mxu0
  %155 = vdwg.mxu0
  %v156 = vld [vmem:[%s3] sm:$0x3]
  %v158 = vsel %vm67, %v156, 0
  %160 = vmatprep.subr.mxu0 0.0
  %161 = vmatpush1.msra.mxu0 %v158
  %162 = vmatprep.subr.mxu0 0.0
  %163 = vmatpush1.msra.mxu0 0.0
  %164 = vmatprep.subr.mxu0 0.0
  %165 = vmatpush1.msra.mxu0 0.0
  %166 = vmatprep.subr.mxu0 0.0
  %167 = vmatpush1.msra.mxu0 0.0
  %168 = vmatprep.subr.mxu0 0.0
  %169 = vmatpush1.msra.mxu0 0.0
  %170 = vmatprep.subr.mxu0 0.0
  %171 = vmatpush1.msra.mxu0 0.0
  %172 = vmatprep.subr.mxu0 0.0
  %173 = vmatpush1.msra.mxu0 0.0
  %174 = vmatprep.subr.mxu0 0.0
  %175 = vmatpush1.msra.mxu0 0.0
  %176 = vmatprep.subr.mxu0 0.0
  %177 = vmatpush1.msra.mxu0 0.0
  %178 = vmatprep.subr.mxu0 0.0
  %179 = vmatpush1.msra.mxu0 0.0
  %180 = vmatprep.subr.mxu0 0.0
  %181 = vmatpush1.msra.mxu0 0.0
  %182 = vmatprep.subr.mxu0 0.0
  %183 = vmatpush1.msra.mxu0 0.0
  %184 = vmatprep.subr.mxu0 0.0
  %185 = vmatpush1.msra.mxu0 0.0
  %186 = vmatprep.subr.mxu0 0.0
  %187 = vmatpush1.msra.mxu0 0.0
  %188 = vmatprep.subr.mxu0 0.0
  %189 = vmatpush1.msra.mxu0 0.0
  %190 = vmatprep.subr.mxu0 0.0
  %191 = vmatpush1.msra.mxu0 0.0
  %192 = vmatprep.subr.mxu0 0.0
  %193 = vmatpush1.msra.mxu0 0.0
  %194 = vmatprep.subr.mxu0 0.0
  %195 = vmatpush1.msra.mxu0 0.0
  %196 = vmatprep.subr.mxu0 0.0
  %197 = vmatpush1.msra.mxu0 0.0
  %198 = vmatprep.subr.mxu0 0.0
  %199 = vmatpush1.msra.mxu0 0.0
  %200 = vmatprep.subr.mxu0 0.0
  %201 = vmatpush1.msra.mxu0 0.0
  %202 = vmatprep.subr.mxu0 0.0
  %203 = vmatpush1.msra.mxu0 0.0
  %204 = vmatprep.subr.mxu0 0.0
  %205 = vmatpush1.msra.mxu0 0.0
  %206 = vmatprep.subr.mxu0 0.0
  %207 = vmatpush1.msra.mxu0 0.0
  %208 = vmatprep.subr.mxu0 0.0
  %209 = vmatpush1.msra.mxu0 0.0
  %210 = vmatprep.subr.mxu0 0.0
  %211 = vmatpush1.msra.mxu0 0.0
  %212 = vmatprep.subr.mxu0 0.0
  %213 = vmatpush1.msra.mxu0 0.0
  %214 = vmatprep.subr.mxu0 0.0
  %215 = vmatpush1.msra.mxu0 0.0
  %216 = vmatprep.subr.mxu0 0.0
  %217 = vmatpush1.msra.mxu0 0.0
  %218 = vmatprep.subr.mxu0 0.0
  %219 = vmatpush1.msra.mxu0 0.0
  %220 = vmatprep.subr.mxu0 0.0
  %221 = vmatpush1.msra.mxu0 0.0
  %222 = vmatprep.subr.mxu0 0.0
  %223 = vmatpush1.msra.mxu0 0.0
  %224 = vmatprep.mubr.f32.mxu0 0.0
  %225 = vmatmul.mubr.f32.gmra.mrb[0].mxu0 %v56
  %v226 = vpop.f32.mrb[0].mxu0
  %v227 = vadd.f32 0.0, %v226
  %v228 = vpop.f32.mrb[0].mxu0
  %229 = vmatprep.mubr.f32.mxu0 0.0
  %230 = vmatmul.mubr.f32.gmra.mrb[0].mxu0 %v59
  %v231 = vpop.f32.mrb[0].mxu0
  %v232 = vadd.f32 0.0, %v231
  %v233 = vpop.f32.mrb[0].mxu0
  %234 = vmatprep.mubr.f32.mxu0 0.0
  %235 = vmatmul.mubr.f32.gmra.mrb[0].mxu0 %v62
  %v236 = vpop.f32.mrb[0].mxu0
  %v237 = vadd.f32 0.0, %v236
  %v238 = vpop.f32.mrb[0].mxu0
  %239 = vmatprep.mubr.f32.mxu0 0.0
  %240 = vmatmul.mubr.f32.gmra.mrb[0].mxu0 %v65
  %v241 = vpop.f32.mrb[0].mxu0
  %v242 = vadd.f32 0.0, %v241
  %v243 = vpop.f32.mrb[0].mxu0
  %244 = vdwg.mxu0
  %v245 = vld [vmem:[%s0] sm:$0xff]
  %v246 = vld [vmem:[%s0 + $0x8] sm:$0xff]
  %v247 = vld [vmem:[%s0 + $0x10] sm:$0xff]
  %v248 = vld [vmem:[%s0 + $0x18] sm:$0xff]
  %v249 = vsub.f32 %v245, %v138
  %v250 = vsub.f32 %v246, %v143
  %v251 = vsub.f32 %v247, %v148
  %v252 = vsub.f32 %v248, %v153
  %v253 = vmul.f32 %v249, %v227
  %v254 = vmul.f32 %v250, %v232
  %v255 = vmul.f32 %v251, %v237
  %v256 = vmul.f32 %v252, %v242
  %v257 = vld [vmem:[%s4] sm:$0x1]
  %v259 = vlaneseq
  %v260 = vshrl.u32 %v259, 7
  %v261 = vsub.s32 0, %v260
  %v262 = vrot.slane %v257, %v261
  %v264 = vmul.f32 %v253, %v262
  %v265 = vmul.f32 %v254, %v262
  %v266 = vmul.f32 %v255, %v262
  %v267 = vmul.f32 %v256, %v262
  %v268 = vld [vmem:[%s5] sm:$0x1]
  %v270 = vlaneseq
  %v271 = vshrl.u32 %v270, 7
  %v272 = vsub.s32 0, %v271
  %v273 = vrot.slane %v268, %v272
  %v275 = vadd.f32 %v264, %v273
  %v276 = vadd.f32 %v265, %v273
  %v277 = vadd.f32 %v266, %v273
  %v278 = vadd.f32 %v267, %v273
  %v279 = vsub.f32 0.0, %v275
  %v280 = vsub.f32 0.0, %v276
  %v281 = vsub.f32 0.0, %v277
  %v282 = vsub.f32 0.0, %v278
  %v283 = vmul.f32 %v279, 1.442695
  %v284 = vpow.pop %v283
  %v285 = vmul.f32 %v280, 1.442695
  %v286 = vpow.pop %v285
  %v287 = vmul.f32 %v281, 1.442695
  %v288 = vpow.pop %v287
  %v289 = vmul.f32 %v282, 1.442695
  %v290 = vpow.pop %v289
  %v291 = vadd.f32 %v284, 1.0
  %v292 = vadd.f32 %v286, 1.0
  %v293 = vadd.f32 %v288, 1.0
  %v294 = vadd.f32 %v290, 1.0
  %v295 = vrcp.pop %v291
  %v296 = vmul.f32 1.0, %v295
  %v297 = vrcp.pop %v292
  %v298 = vmul.f32 1.0, %v297
  %v299 = vrcp.pop %v293
  %v300 = vmul.f32 1.0, %v299
  %v301 = vrcp.pop %v294
  %v302 = vmul.f32 1.0, %v301
  %v303 = vmul.f32 %v275, %v296
  %v304 = vmul.f32 %v276, %v298
  %v305 = vmul.f32 %v277, %v300
  %v306 = vmul.f32 %v278, %v302
  %v307 = vpack.c.bf16 %v304, %v303
  %v308 = vpack.c.bf16 %v306, %v305
  %v311 = vunpack.c.l.b16 %v307
  %v312 = vunpack.c.h.b16 %v307
  %v313 = vunpack.c.l.b16 %v308
  %v314 = vunpack.c.h.b16 %v308
  %v315 = vpack.c.b16 %v311, %v311
  %v316 = vpack.c.b16 %v312, %v312
  %v317 = vpack.c.b16 %v313, %v313
  %v318 = vpack.c.b16 %v314, %v314
  %vm323 = vcmask 125952
  %324 = vst.msk [vmem:[%s6] sm:$0xf] %vm323, %v315
  %325 = vst.msk [vmem:[%s6 + $0x4] sm:$0xf] %vm323, %v316
  %326 = vst.msk [vmem:[%s6 + $0x8] sm:$0xf] %vm323, %v317
  %327 = vst.msk [vmem:[%s6 + $0xc] sm:$0xf] %vm323, %v318
  // Predicated region
  $region26: #{tpu_custom_call.1} parent=0 // pred_check
    _
  $region27: #{tpu_custom_call.1} parent=0 // pred_check_branch
    %329 = sbr.rel (0) target = $region29
  $region28: #{tpu_custom_call.1} parent=0 // pred_region
    _
  $region29: #{tpu_custom_call.1} parent=0 // pred_fallthru
    _
  // Predicated region
  $region30: #{tpu_custom_call.1} parent=0 // pred_check
    _
  $region31: #{tpu_custom_call.1} parent=0 // pred_check_branch
    %331 = sbr.rel (0) target = $region33
  $region32: #{tpu_custom_call.1} parent=0 // pred_region
    _
  $region33: #{tpu_custom_call.1} parent=0 // pred_fallthru
    _

</llo_original>
